<compile_context>
chip_gen: v7x
topology: tpu7x:2x2x1
jax: 0.10.0
libtpu: 0.0.40
codegen_flags: <defaults>
</compile_context>

<pallas_src>
import functools

import jax
import jax.numpy as jnp
from jax import lax
from jax.experimental import pallas as pl
from jax.experimental.pallas import tpu as pltpu


# Lane-dense tiles, sized so double-buffered in/out blocks stay far under the
# smallest scoped-VMEM budget (v7x: 32 MiB scoped / 64 MiB physical).
TM, TN, TK = 256, 128, 128


def _round_up(a, b):
    return (a + b - 1) // b * b


def _fused_matmul_kernel(lab_ref, a_ref, b_ref, scale_ref, offset_ref,
                         o_ref, acc_ref, *, use_act):
    """One (TM, TN) tile of patches @ weights with BN/ReLU/LAB epilogue."""
    k = pl.program_id(2)

    @pl.when(k == 0)
    def _():
        acc_ref[...] = jnp.zeros_like(acc_ref)

    acc_ref[...] += jnp.dot(a_ref[...], b_ref[...],
                            preferred_element_type=jnp.float32)

    @pl.when(k == pl.num_programs(2) - 1)
    def _():
        # Folded eval-mode BatchNorm: per-output-channel affine (f32).
        y = acc_ref[...] * scale_ref[...] + offset_ref[...]
        if use_act:
            y = jnp.maximum(y, 0.0)            # ReLU
        y = lab_ref[0] * y + lab_ref[1]        # LearnableAffineBlock
        o_ref[...] = y.astype(o_ref.dtype)


def _fused_matmul(a, b, bn_scale, bn_offset, lab, use_act, out_dtype):
    m_p, k_p = a.shape
    _, n_p = b.shape
    grid = (m_p // TM, n_p // TN, k_p // TK)
    kernel = functools.partial(_fused_matmul_kernel, use_act=use_act)
    return pl.pallas_call(
        kernel,
        out_shape=jax.ShapeDtypeStruct((m_p, n_p), out_dtype),
        grid_spec=pltpu.PrefetchScalarGridSpec(
            num_scalar_prefetch=0,
            grid=grid,
            in_specs=[
                pl.BlockSpec(memory_space=pltpu.SMEM),            # lab (2,) f32
                pl.BlockSpec((TM, TK), lambda i, j, k: (i, k)),   # patches
                pl.BlockSpec((TK, TN), lambda i, j, k: (k, j)),   # weights
                pl.BlockSpec((1, TN), lambda i, j, k: (0, j)),    # BN scale
                pl.BlockSpec((1, TN), lambda i, j, k: (0, j)),    # BN offset
            ],
            out_specs=pl.BlockSpec((TM, TN), lambda i, j, k: (i, j)),
            scratch_shapes=[pltpu.VMEM((TM, TN), jnp.float32)],
        ),
        compiler_params=pltpu.CompilerParams(
            dimension_semantics=("parallel", "parallel", "arbitrary")),
    )(lab, a, b, bn_scale, bn_offset)


def _conv_group(xp, w, bn_scale, bn_offset, lab, stride, oh, ow, use_act):
    """conv + fused epilogue for one channel group (xp already spatially padded)."""
    n, c, _, _ = xp.shape
    c_out, _, kh, kw = w.shape

    # im2col: rows = output pixels, cols = (c_in, kh, kw) flattened
    patches = []
    for i in range(kh):
        for j in range(kw):
            patches.append(
                xp[:, :, i:i + stride * (oh - 1) + 1:stride,
                      j:j + stride * (ow - 1) + 1:stride])
    cols = jnp.stack(patches, axis=2)                       # (N, C, KH*KW, OH, OW)
    cols = cols.reshape(n, c * kh * kw, oh, ow)
    cols = cols.transpose(0, 2, 3, 1).reshape(n * oh * ow, c * kh * kw)

    wk = w.reshape(c_out, c * kh * kw).T.astype(cols.dtype)  # (K, C_out)

    m, k = cols.shape
    m_p, k_p, n_p = _round_up(m, TM), _round_up(k, TK), _round_up(c_out, TN)
    a = jnp.pad(cols, ((0, m_p - m), (0, k_p - k)))
    b = jnp.pad(wk, ((0, k_p - k), (0, n_p - c_out)))
    s = jnp.pad(bn_scale.astype(jnp.float32).reshape(1, -1),
                ((0, 0), (0, n_p - c_out)))
    o = jnp.pad(bn_offset.astype(jnp.float32).reshape(1, -1),
                ((0, 0), (0, n_p - c_out)))

    y = _fused_matmul(a, b, s, o, lab, use_act, xp.dtype)
    return y[:m, :c_out].reshape(n, oh, ow, c_out).transpose(0, 3, 1, 2)


@functools.partial(jax.jit,
                   static_argnames=("stride", "groups", "padding",
                                    "use_act", "use_lab"))
def conv_bn_act(x, weight, bn_gamma, bn_beta, bn_mean, bn_var,
                lab_scale, lab_bias, *, stride=1, groups=1, padding='',
                use_act=True, use_lab=False, eps=1e-5):
    """ConvBNAct.forward: conv2d(no bias) -> BatchNorm(eval) -> ReLU -> LAB."""
    n, c_in, h, w = x.shape
    c_out, c_in_g, kh, kw = weight.shape

    if padding == 'same':
        xp = jnp.pad(x, ((0, 0), (0, 0), (0, 1), (0, 1)))   # ZeroPad2d([0,1,0,1])
    else:
        p = (kh - 1) // 2
        xp = jnp.pad(x, ((0, 0), (0, 0), (p, p), (p, p)))
    hp, wp = xp.shape[2], xp.shape[3]
    oh = (hp - kh) // stride + 1
    ow = (wp - kw) // stride + 1

    # Fold eval-mode BatchNorm into a per-output-channel affine, kept in f32.
    bn_scale = bn_gamma.astype(jnp.float32) / jnp.sqrt(
        bn_var.astype(jnp.float32) + eps)
    bn_offset = bn_beta.astype(jnp.float32) - bn_scale * bn_mean.astype(jnp.float32)

    # LearnableAffineBlock params (identity unless use_act and use_lab).
    if use_act and use_lab:
        lab = jnp.concatenate([jnp.ravel(lab_scale),
                               jnp.ravel(lab_bias)]).astype(jnp.float32)
    else:
        lab = jnp.array([1.0, 0.0], dtype=jnp.float32)

    c_out_g = c_out // groups
    outs = []
    for g in range(groups):
        outs.append(_conv_group(
            xp[:, g * c_in_g:(g + 1) * c_in_g],
            weight[g * c_out_g:(g + 1) * c_out_g],
            bn_scale[g * c_out_g:(g + 1) * c_out_g],
            bn_offset[g * c_out_g:(g + 1) * c_out_g],
            lab, stride, oh, ow, use_act))
    return outs[0] if groups == 1 else jnp.concatenate(outs, axis=1)


if __name__ == "__main__":
    key = jax.random.PRNGKey(0)
    kx, kw_, kg, kb, km, kv = jax.random.split(key, 6)

    n, c_in, hw = 2, 4, 16
    c_out, ksz, stride = 8, 3, 1

    x = jax.random.normal(kx, (n, c_in, hw, hw), dtype=jnp.float32)
    weight = 0.1 * jax.random.normal(kw_, (c_out, c_in, ksz, ksz), dtype=jnp.float32)
    bn_gamma = 1.0 + 0.1 * jax.random.normal(kg, (c_out,), dtype=jnp.float32)
    bn_beta = 0.1 * jax.random.normal(kb, (c_out,), dtype=jnp.float32)
    bn_mean = 0.1 * jax.random.normal(km, (c_out,), dtype=jnp.float32)
    bn_var = 0.5 + jnp.abs(jax.random.normal(kv, (c_out,), dtype=jnp.float32))
    lab_scale = jnp.array([1.3], dtype=jnp.float32)   # LearnableAffineBlock params
    lab_bias = jnp.array([0.05], dtype=jnp.float32)

    out = conv_bn_act(x, weight, bn_gamma, bn_beta, bn_mean, bn_var,
                      lab_scale, lab_bias, stride=stride, groups=1,
                      padding='', use_act=True, use_lab=True)
    jax.block_until_ready(out)

    # Pure-JAX reference of ConvBNAct.forward (eval-mode BN).
    p = (ksz - 1) // 2
    ref = lax.conv_general_dilated(
        x, weight, (stride, stride), [(p, p), (p, p)],
        dimension_numbers=('NCHW', 'OIHW', 'NCHW'),
        precision=lax.Precision.HIGHEST)
    a_bn = bn_gamma / jnp.sqrt(bn_var + 1e-5)
    b_bn = bn_beta - a_bn * bn_mean
    ref = ref * a_bn[None, :, None, None] + b_bn[None, :, None, None]
    ref = jnp.maximum(ref, 0.0)
    ref = lab_scale[0] * ref + lab_bias[0]

    assert out.shape == ref.shape and out.dtype == x.dtype
    err = float(jnp.max(jnp.abs(out - ref)))
    assert err < 1e-2, f"max abs err {err}"
    print("KERNEL_OK")
</pallas_src>

<mosaic_0001>
module attributes {stable_mosaic.version = 11 : i64} {
  func.func @_fused_matmul_kernel(%arg0: i32, %arg1: i32, %arg2: i32, %arg3: memref<2xf32, #tpu.memory_space<smem>>, %arg4: memref<256x128xf32, #tpu.memory_space<vmem>>, %arg5: memref<128x128xf32, #tpu.memory_space<vmem>>, %arg6: memref<1x128xf32, #tpu.memory_space<vmem>>, %arg7: memref<1x128xf32, #tpu.memory_space<vmem>>, %arg8: memref<256x128xf32, #tpu.memory_space<vmem>>, %arg9: memref<256x128xf32, #tpu.memory_space<vmem>>) attributes {dimension_semantics = [#tpu.dimension_semantics<parallel>, #tpu.dimension_semantics<parallel>, #tpu.dimension_semantics<arbitrary>], iteration_bounds = array<i64: 2, 1, 1>, scalar_prefetch = 0 : i64, scratch_operands = 1 : i64, tpu.core_type = #tpu.core_type<tc>, window_params = [{transform_indices = @transform_0, window_bounds = array<i64: 2>}, {transform_indices = @transform_1, window_bounds = array<i64: 256, 128>}, {transform_indices = @transform_2, window_bounds = array<i64: 128, 128>}, {transform_indices = @transform_3, window_bounds = array<i64: 1, 128>}, {transform_indices = @transform_4, window_bounds = array<i64: 1, 128>}, {transform_indices = @transform_5, window_bounds = array<i64: 256, 128>}]} {
    %c0_i32 = arith.constant 0 : i32
    %0 = arith.cmpi eq, %arg2, %c0_i32 : i32
    %1 = arith.extui %0 : i1 to i32
    %c0_i32_0 = arith.constant 0 : i32
    %2 = arith.cmpi ne, %1, %c0_i32_0 : i32
    scf.if %2 {
      %cst_10 = arith.constant 0.000000e+00 : f32
      %12 = vector.broadcast %cst_10 : f32 to vector<256x128xf32>
      %c0_11 = arith.constant 0 : index
      %c0_12 = arith.constant 0 : index
      %13 = vector.load %arg9[%c0_11, %c0_12] : memref<256x128xf32, #tpu.memory_space<vmem>>, vector<256x128xf32>
      tpu.vector_store %arg9[%c0_11, %c0_12], %12 {strides = array<i32>} : memref<256x128xf32, #tpu.memory_space<vmem>>, vector<256x128xf32>,
    } else {
    }
    %c0 = arith.constant 0 : index
    %c0_1 = arith.constant 0 : index
    %3 = vector.load %arg9[%c0, %c0_1] : memref<256x128xf32, #tpu.memory_space<vmem>>, vector<256x128xf32>
    %c0_2 = arith.constant 0 : index
    %c0_3 = arith.constant 0 : index
    %4 = vector.load %arg4[%c0_2, %c0_3] : memref<256x128xf32, #tpu.memory_space<vmem>>, vector<256x128xf32>
    %c0_4 = arith.constant 0 : index
    %c0_5 = arith.constant 0 : index
    %5 = vector.load %arg5[%c0_4, %c0_5] : memref<128x128xf32, #tpu.memory_space<vmem>>, vector<128x128xf32>
    %cst = arith.constant dense<0.000000e+00> : vector<256x128xf32>
    %6 = tpu.matmul %4, %5, %cst {dimension_numbers = #tpu.dot_dimension_numbers<[1], [0], [0], [1], [0, 0, 1, 1], [], []>} : vector<256x128xf32>, vector<128x128xf32>, vector<256x128xf32> -> vector<256x128xf32>
    %7 = arith.addf %3, %6 : vector<256x128xf32>
    %c0_6 = arith.constant 0 : index
    %c0_7 = arith.constant 0 : index
    %8 = vector.load %arg9[%c0_6, %c0_7] : memref<256x128xf32, #tpu.memory_space<vmem>>, vector<256x128xf32>
    tpu.vector_store %arg9[%c0_6, %c0_7], %7 {strides = array<i32>} : memref<256x128xf32, #tpu.memory_space<vmem>>, vector<256x128xf32>,
    %c0_i32_8 = arith.constant 0 : i32
    %9 = arith.cmpi eq, %arg2, %c0_i32_8 : i32
    %10 = arith.extui %9 : i1 to i32
    %c0_i32_9 = arith.constant 0 : i32
    %11 = arith.cmpi ne, %10, %c0_i32_9 : i32
    scf.if %11 {
      %c0_10 = arith.constant 0 : index
      %c0_11 = arith.constant 0 : index
      %12 = vector.load %arg9[%c0_10, %c0_11] : memref<256x128xf32, #tpu.memory_space<vmem>>, vector<256x128xf32>
      %c0_12 = arith.constant 0 : index
      %c0_13 = arith.constant 0 : index
      %13 = vector.load %arg6[%c0_12, %c0_13] : memref<1x128xf32, #tpu.memory_space<vmem>>, vector<1x128xf32>
      %14 = vector.broadcast %13 : vector<1x128xf32> to vector<256x128xf32>
      %15 = arith.mulf %12, %14 : vector<256x128xf32>
      %c0_14 = arith.constant 0 : index
      %c0_15 = arith.constant 0 : index
      %16 = vector.load %arg7[%c0_14, %c0_15] : memref<1x128xf32, #tpu.memory_space<vmem>>, vector<1x128xf32>
      %17 = vector.broadcast %16 : vector<1x128xf32> to vector<256x128xf32>
      %18 = arith.addf %15, %17 : vector<256x128xf32>
      %cst_16 = arith.constant 0.000000e+00 : f32
      %19 = vector.broadcast %cst_16 : f32 to vector<256x128xf32>
      %20 = arith.maximumf %18, %19 : vector<256x128xf32>
      %c0_17 = arith.constant 0 : index
      %21 = memref.load %arg3[%c0_17] : memref<2xf32, #tpu.memory_space<smem>>
      %22 = vector.broadcast %21 : f32 to vector<256x128xf32>
      %23 = arith.mulf %22, %20 : vector<256x128xf32>
      %c1 = arith.constant 1 : index
      %24 = memref.load %arg3[%c1] : memref<2xf32, #tpu.memory_space<smem>>
      %25 = vector.broadcast %24 : f32 to vector<256x128xf32>
      %26 = arith.addf %23, %25 : vector<256x128xf32>
      %c0_18 = arith.constant 0 : index
      %c0_19 = arith.constant 0 : index
      %27 = vector.load %arg8[%c0_18, %c0_19] : memref<256x128xf32, #tpu.memory_space<vmem>>, vector<256x128xf32>
      tpu.vector_store %arg8[%c0_18, %c0_19], %26 {strides = array<i32>} : memref<256x128xf32, #tpu.memory_space<vmem>>, vector<256x128xf32>,
    } else {
    }
    return
  }
  func.func @transform_0(%arg0: i32, %arg1: i32, %arg2: i32) -> i32 {
    %c0_i32 = arith.constant 0 : i32
    %c0_i32_0 = arith.constant 0 : i32
    return %c0_i32 : i32
  }
  func.func @transform_1(%arg0: i32, %arg1: i32, %arg2: i32) -> (i32, i32) {
    %c0_i32 = arith.constant 0 : i32
    return %arg0, %arg2 : i32, i32
  }
  func.func @transform_2(%arg0: i32, %arg1: i32, %arg2: i32) -> (i32, i32) {
    %c0_i32 = arith.constant 0 : i32
    return %arg2, %arg1 : i32, i32
  }
  func.func @transform_3(%arg0: i32, %arg1: i32, %arg2: i32) -> (i32, i32) {
    %c0_i32 = arith.constant 0 : i32
    %c0_i32_0 = arith.constant 0 : i32
    return %c0_i32, %arg1 : i32, i32
  }
  func.func @transform_4(%arg0: i32, %arg1: i32, %arg2: i32) -> (i32, i32) {
    %c0_i32 = arith.constant 0 : i32
    %c0_i32_0 = arith.constant 0 : i32
    return %c0_i32, %arg1 : i32, i32
  }
  func.func @transform_5(%arg0: i32, %arg1: i32, %arg2: i32) -> (i32, i32) {
    %c0_i32 = arith.constant 0 : i32
    return %arg0, %arg1 : i32, i32
  }
}

</mosaic_0001>

<llo_original>
// kernel: conv_bn_act.1
$region0: #{conv_bn_act.1}
  #allocation0 [shape = 'u32[]', space=smem, size = 0x4, offset = 0x4, fixed_abs, tag = 'smem constant byte address 0x4 - core index']
  #allocation1 [shape = 'u32[144,128]{1,0:T(1,128)}', space=vmem, size = 0x12000, scoped, tag = 'internal scratch']
  #allocation2 [shape = 'f32[256,128]{1,0:T(8,128)}', space=vmem, size = 0x20000, scoped, tag = 'scratch operand']
  %s0 = inlined_call_operand.vmem [shape: f32[2], index: 0, kind: input, shape index: {}]
  %s1 = inlined_call_operand.vmem [shape: f32[512,128], index: 1, kind: input, shape index: {}]
  %s2 = inlined_call_operand.vmem [shape: f32[128,128], index: 2, kind: input, shape index: {}]
  %s3 = inlined_call_operand.vmem [shape: f32[1,128], index: 3, kind: input, shape index: {}]
  %s4 = inlined_call_operand.vmem [shape: f32[1,128], index: 4, kind: input, shape index: {}]
  %s5 = inlined_call_operand.vmem [shape: f32[512,128], index: 5, kind: output, shape index: {}]
  %s6 = sld [smem:[#allocation0]]
  $region65: #{conv_bn_act.1} parent=0
    _
  %s8 = ssub.s32 1, %s6
  %s9 = scalar_select 0, %s8, %s6
  $region1: #{conv_bn_act.1} parent=0
    #allocation3 [shape = 'u8[512]{0}', space=smem, size = 0x200, scoped, tag = 'input window, operand 0, single buffered']
    #allocation4 [shape = 's32[2]{0}', space=sflag, size = 0x8, scoped, tag = 'scoped memory for conv_bn_act.1']
    %10 = vsyncpa [#allocation4], 0
    loop: start=0, step=1, limit=4
    $region2: #{conv_bn_act.1} parent=1 // loop_pre_header
      _
    $region3: #{conv_bn_act.1} parent=1 // loop_header
      %s12 = sphi 0, %s16
      %p13 = scmp.ge.s32.totalorder %s12, 4
      %s19 = sphi 0, %s38
      %s20 = sphi 0, %s34
      %s21 = sphi 0, %s30
      %s22 = sphi 0, %s19
      %s23 = sphi 0, %s20
      %s24 = sphi 0, %s21
      %s25 = sphi 0, %s22
      %s26 = sphi 0, %s23
      %s27 = sphi 0, %s24
      %s39 = sphi 0, %s39
      %s41 = sphi 0, %s39
      %s42 = sphi 0, %s41
      %s56 = sphi 0, %s42
      %s64 = sphi 0, %s66
      %s67 = sphi 0, %s64
      %s68 = sphi 0, %s67
      %s84 = sphi 0, %s68
      %s92 = sphi 0, %s94
      %s95 = sphi 0, %s92
      %s96 = sphi 0, %s95
      %s112 = sphi 0, %s96
      %s118 = sphi 0, %s120
      %s121 = sphi 0, %s118
      %s122 = sphi 0, %s121
      %s138 = sphi 0, %s122
      %s144 = sphi 0, %s146
      %s147 = sphi 0, %s144
      %s148 = sphi 0, %s147
      %s164 = sphi 0, %s148
      %s172 = sphi 0, %s174
      %s175 = sphi 0, %s172
      %s176 = sphi 0, %s175
      %s192 = sphi 0, %s176
    $region4: #{conv_bn_act.1} parent=1 // loop_header_branch
      %15 = sbr.rel (%p13) target = $region8
    $region5: #{conv_bn_act.1} parent=1 // loop_body
      %s17 = ssub.s32 %s12, 1
      %s18 = ssub.s32 %s12, 2
      %s28 = sadd.s32 1, %s21
      %p29 = scmp.ge.s32.totalorder %s28, 1
      %s30 = scalar_select %p29, 0, %s28
      %s31 = sadd.s32 1, %s20
      %s32 = scalar_select %p29, %s31, %s20
      %p33 = scmp.ge.s32.totalorder %s32, 1
      %s34 = scalar_select %p33, 0, %s32
      %s35 = sadd.s32 1, %s19
      %s36 = scalar_select %p33, %s35, %s19
      %p37 = scmp.ge.s32.totalorder %s36, 2
      %s38 = scalar_select %p37, 0, %s36
      %s40 = sadd.s32 %s39, 1
      %p43 = scmp.eq.s32.totalorder %s12, 1
      %p44 = scmp.ne.s32.totalorder %s39, %s41
      %p45 = scmp.eq.s32.totalorder %s12, 0
      %p46 = por %p44, %p45
      %p47 = scmp.ne.s32.totalorder %s39, %s41
      %p48 = scmp.eq.s32.totalorder %s17, 1
      %p49 = por %p47, %p48
      %p50 = scmp.ne.s32.totalorder %s41, %s42
      %p51 = scmp.eq.s32.totalorder %s17, 0
      %p52 = por %p50, %p51
      %p53 = scmp.ne.s32.totalorder %s41, %s42
      %p54 = scmp.eq.s32.totalorder %s18, 1
      %p55 = por %p53, %p54
      %p57 = scmp.ne.s32.totalorder %s42, %s56
      %p58 = scmp.eq.s32.totalorder %s18, 0
      %p59 = por %p57, %p58
      %s60 = ssub.s32 %s19, %s38
      %s61 = ssub.s32 %s21, %s30
      %s62 = sor.u32 %s60, %s61
      %p63 = scmp.eq.s32.totalorder %s62, 0
      %s65 = sadd.s32 %s64, 1
      %s66 = scalar_select %p63, %s64, %s65
      %p69 = pneg %p63
      %p70 = scmp.eq.s32.totalorder %s12, 1
      %p71 = por %p69, %p70
      %p72 = scmp.ne.s32.totalorder %s64, %s67
      %p73 = scmp.eq.s32.totalorder %s12, 0
      %p74 = por %p72, %p73
      %p75 = scmp.ne.s32.totalorder %s64, %s67
      %p76 = scmp.eq.s32.totalorder %s17, 1
      %p77 = por %p75, %p76
      %p78 = scmp.ne.s32.totalorder %s67, %s68
      %p79 = scmp.eq.s32.totalorder %s17, 0
      %p80 = por %p78, %p79
      %p81 = scmp.ne.s32.totalorder %s67, %s68
      %p82 = scmp.eq.s32.totalorder %s18, 1
      %p83 = por %p81, %p82
      %p85 = scmp.ne.s32.totalorder %s68, %s84
      %p86 = scmp.eq.s32.totalorder %s18, 0
      %p87 = por %p85, %p86
      %s88 = ssub.s32 %s21, %s30
      %s89 = ssub.s32 %s20, %s34
      %s90 = sor.u32 %s88, %s89
      %p91 = scmp.eq.s32.totalorder %s90, 0
      %s93 = sadd.s32 %s92, 1
      %s94 = scalar_select %p91, %s92, %s93
      %p97 = pneg %p91
      %p98 = scmp.eq.s32.totalorder %s12, 1
      %p99 = por %p97, %p98
      %p100 = scmp.ne.s32.totalorder %s92, %s95
      %p101 = scmp.eq.s32.totalorder %s12, 0
      %p102 = por %p100, %p101
      %p103 = scmp.ne.s32.totalorder %s92, %s95
      %p104 = scmp.eq.s32.totalorder %s17, 1
      %p105 = por %p103, %p104
      %p106 = scmp.ne.s32.totalorder %s95, %s96
      %p107 = scmp.eq.s32.totalorder %s17, 0
      %p108 = por %p106, %p107
      %p109 = scmp.ne.s32.totalorder %s95, %s96
      %p110 = scmp.eq.s32.totalorder %s18, 1
      %p111 = por %p109, %p110
      %p113 = scmp.ne.s32.totalorder %s96, %s112
      %p114 = scmp.eq.s32.totalorder %s18, 0
      %p115 = por %p113, %p114
      %s116 = ssub.s32 %s20, %s34
      %p117 = scmp.eq.s32.totalorder %s116, 0
      %s119 = sadd.s32 %s118, 1
      %s120 = scalar_select %p117, %s118, %s119
      %p123 = pneg %p117
      %p124 = scmp.eq.s32.totalorder %s12, 1
      %p125 = por %p123, %p124
      %p126 = scmp.ne.s32.totalorder %s118, %s121
      %p127 = scmp.eq.s32.totalorder %s12, 0
      %p128 = por %p126, %p127
      %p129 = scmp.ne.s32.totalorder %s118, %s121
      %p130 = scmp.eq.s32.totalorder %s17, 1
      %p131 = por %p129, %p130
      %p132 = scmp.ne.s32.totalorder %s121, %s122
      %p133 = scmp.eq.s32.totalorder %s17, 0
      %p134 = por %p132, %p133
      %p135 = scmp.ne.s32.totalorder %s121, %s122
      %p136 = scmp.eq.s32.totalorder %s18, 1
      %p137 = por %p135, %p136
      %p139 = scmp.ne.s32.totalorder %s122, %s138
      %p140 = scmp.eq.s32.totalorder %s18, 0
      %p141 = por %p139, %p140
      %s142 = ssub.s32 %s20, %s34
      %p143 = scmp.eq.s32.totalorder %s142, 0
      %s145 = sadd.s32 %s144, 1
      %s146 = scalar_select %p143, %s144, %s145
      %p149 = pneg %p143
      %p150 = scmp.eq.s32.totalorder %s12, 1
      %p151 = por %p149, %p150
      %p152 = scmp.ne.s32.totalorder %s144, %s147
      %p153 = scmp.eq.s32.totalorder %s12, 0
      %p154 = por %p152, %p153
      %p155 = scmp.ne.s32.totalorder %s144, %s147
      %p156 = scmp.eq.s32.totalorder %s17, 1
      %p157 = por %p155, %p156
      %p158 = scmp.ne.s32.totalorder %s147, %s148
      %p159 = scmp.eq.s32.totalorder %s17, 0
      %p160 = por %p158, %p159
      %p161 = scmp.ne.s32.totalorder %s147, %s148
      %p162 = scmp.eq.s32.totalorder %s18, 1
      %p163 = por %p161, %p162
      %p165 = scmp.ne.s32.totalorder %s148, %s164
      %p166 = scmp.eq.s32.totalorder %s18, 0
      %p167 = por %p165, %p166
      %s168 = ssub.s32 %s19, %s38
      %s169 = ssub.s32 %s20, %s34
      %s170 = sor.u32 %s168, %s169
      %p171 = scmp.eq.s32.totalorder %s170, 0
      %s173 = sadd.s32 %s172, 1
      %s174 = scalar_select %p171, %s172, %s173
      %p177 = pneg %p171
      %p178 = scmp.eq.s32.totalorder %s12, 1
      %p179 = por %p177, %p178
      %p180 = scmp.ne.s32.totalorder %s172, %s175
      %p181 = scmp.eq.s32.totalorder %s12, 0
      %p182 = por %p180, %p181
      %p183 = scmp.ne.s32.totalorder %s172, %s175
      %p184 = scmp.eq.s32.totalorder %s17, 1
      %p185 = por %p183, %p184
      %p186 = scmp.ne.s32.totalorder %s175, %s176
      %p187 = scmp.eq.s32.totalorder %s17, 0
      %p188 = por %p186, %p187
      %p189 = scmp.ne.s32.totalorder %s175, %s176
      %p190 = scmp.eq.s32.totalorder %s18, 1
      %p191 = por %p189, %p190
      %p193 = scmp.ne.s32.totalorder %s176, %s192
      %p194 = scmp.eq.s32.totalorder %s18, 0
      %p195 = por %p193, %p194
      %p196 = scmp.le.s32.totalorder 1, %s12
      %p197 = scmp.lt.s32.totalorder %s12, 3
      %p198 = pnand %p196, %p197
      %p199 = pneg %p198
      // Predicated region
      $region9: #{conv_bn_act.1} parent=5 // pred_check
        _
      $region10: #{conv_bn_act.1} parent=5 // pred_check_branch
        %201 = sbr.rel (%p198) target = $region12
      $region11: #{conv_bn_act.1} parent=5 // pred_region
        %s202 = ssub.s32 %s12, 1
        // Predicated region
        $region13: #{conv_bn_act.1} parent=11 // pred_check
          %p203 = pneg %p52
        $region14: #{conv_bn_act.1} parent=11 // pred_check_branch
          %205 = sbr.rel (%p203) target = $region16
        $region15: #{conv_bn_act.1} parent=11 // pred_region
          %s207 = ssub.s32 16, 16
          %208 = vsyncadd [#allocation4], %s207
          %s210 = sshll.u32 %s0, 4
          %s211 = int_to_ptr.vmem [resolvable:$true] %s210
          %213 = dma.vmem_to_smem %s211, 16, [#allocation3], [#allocation4]
        $region16: #{conv_bn_act.1} parent=11 // pred_fallthru
          _
        // Predicated region
        $region17: #{conv_bn_act.1} parent=11 // pred_check
          %p214 = pneg %p108
        $region18: #{conv_bn_act.1} parent=11 // pred_check_branch
          %216 = sbr.rel (%p214) target = $region20
        $region19: #{conv_bn_act.1} parent=11 // pred_region
          %s217 = smul.u32 16, %s24
          %p218 = scmp.lt.s32.totalorder %s217, 15
          %s219 = scalar_select %p218, %s217, 15
          %p220 = scmp.lt.s32.totalorder %s23, 0
          %s221 = scalar_select %p220, %s23, 0
          %s222 = sadd.s32 %s221, %s219
          %s223 = smul.addr %s222, 8
          %s224 = scalar_lea.vmem %s2, %s223
          %s225 = smul.u32 16, %s24
        $region20: #{conv_bn_act.1} parent=11 // pred_fallthru
          _
        // Predicated region
        $region21: #{conv_bn_act.1} parent=11 // pred_check
          %p226 = pneg %p134
        $region22: #{conv_bn_act.1} parent=11 // pred_check_branch
          %228 = sbr.rel (%p226) target = $region24
        $region23: #{conv_bn_act.1} parent=11 // pred_region
          %p229 = scmp.lt.s32.totalorder %s23, 0
          %s230 = scalar_select %p229, %s23, 0
          %s231 = scalar_lea.vmem %s3, %s230
        $region24: #{conv_bn_act.1} parent=11 // pred_fallthru
          _
        // Predicated region
        $region25: #{conv_bn_act.1} parent=11 // pred_check
          %p232 = pneg %p160
        $region26: #{conv_bn_act.1} parent=11 // pred_check_branch
          %234 = sbr.rel (%p232) target = $region28
        $region27: #{conv_bn_act.1} parent=11 // pred_region
          %p235 = scmp.lt.s32.totalorder %s23, 0
          %s236 = scalar_select %p235, %s23, 0
          %s237 = scalar_lea.vmem %s4, %s236
        $region28: #{conv_bn_act.1} parent=11 // pred_fallthru
          _
      $region12: #{conv_bn_act.1} parent=5 // pred_fallthru
        _
      %p238 = scmp.lt.s32.totalorder %s12, 2
      // Predicated region
      $region29: #{conv_bn_act.1} parent=5 // pred_check
        %p239 = pneg %p238
      $region30: #{conv_bn_act.1} parent=5 // pred_check_branch
        %241 = sbr.rel (%p239) target = $region32
      $region31: #{conv_bn_act.1} parent=5 // pred_region
        // Predicated region
        $region33: #{conv_bn_act.1} parent=31 // pred_check
          %p242 = pneg %p74
        $region34: #{conv_bn_act.1} parent=31 // pred_check_branch
          %244 = sbr.rel (%p242) target = $region36
        $region35: #{conv_bn_act.1} parent=31 // pred_region
          %s245 = smul.u32 32, %s19
          %p246 = scmp.lt.s32.totalorder %s245, 63
          %s247 = scalar_select %p246, %s245, 63
          %p248 = scmp.lt.s32.totalorder %s21, 0
          %s249 = scalar_select %p248, %s21, 0
          %s250 = sadd.s32 %s249, %s247
          %s251 = smul.addr %s250, 8
          %s252 = scalar_lea.vmem %s1, %s251
          %s253 = smul.u32 32, %s19
        $region36: #{conv_bn_act.1} parent=31 // pred_fallthru
          _
      $region32: #{conv_bn_act.1} parent=5 // pred_fallthru
        _
      %p254 = scmp.le.s32.totalorder 1, %s12
      %p255 = scmp.lt.s32.totalorder %s12, 3
      %p256 = pnand %p254, %p255
      %p257 = pneg %p256
      // Predicated region
      $region37: #{conv_bn_act.1} parent=5 // pred_check
        _
      $region38: #{conv_bn_act.1} parent=5 // pred_check_branch
        %259 = sbr.rel (%p256) target = $region40
      $region39: #{conv_bn_act.1} parent=5 // pred_region
        %s260 = ssub.s32 %s12, 1
        // Predicated region
        $region41: #{conv_bn_act.1} parent=39 // pred_check
          %p261 = pneg %p52
        $region42: #{conv_bn_act.1} parent=39 // pred_check_branch
          %263 = sbr.rel (%p261) target = $region44
        $region43: #{conv_bn_act.1} parent=39 // pred_region
          %264 = dma.done [#allocation4], 16
        $region44: #{conv_bn_act.1} parent=39 // pred_fallthru
          _
        %265 = sfence
        %p266 = pneg %p52
        %p267 = pneg %p49
        %s268 = smul.u32 32, %s22
        %p269 = scmp.lt.s32.totalorder %s268, 63
        %s270 = scalar_select %p269, %s268, 63
        %p271 = scmp.lt.s32.totalorder %s24, 0
        %s272 = scalar_select %p271, %s24, 0
        %s273 = sadd.s32 %s272, %s270
        %s274 = smul.addr %s273, 8
        %s275 = scalar_lea.vmem %s1, %s274
        %p276 = pneg %p80
        %p277 = pneg %p77
        %s278 = smul.u32 16, %s24
        %p279 = scmp.lt.s32.totalorder %s278, 15
        %s280 = scalar_select %p279, %s278, 15
        %p281 = scmp.lt.s32.totalorder %s23, 0
        %s282 = scalar_select %p281, %s23, 0
        %s283 = sadd.s32 %s282, %s280
        %s284 = smul.addr %s283, 8
        %s285 = scalar_lea.vmem %s2, %s284
        %p286 = pneg %p108
        %p287 = pneg %p105
        %p288 = scmp.lt.s32.totalorder %s23, 0
        %s289 = scalar_select %p288, %s23, 0
        %s290 = scalar_lea.vmem %s3, %s289
        %p291 = pneg %p134
        %p292 = pneg %p131
        %p293 = scmp.lt.s32.totalorder %s23, 0
        %s294 = scalar_select %p293, %s23, 0
        %s295 = scalar_lea.vmem %s4, %s294
        %p296 = pneg %p160
        %p297 = pneg %p157
        %p298 = pneg %p188
        %p299 = pneg %p185
        %s300 = smul.u32 32, %s22
        %p301 = scmp.lt.s32.totalorder %s300, 63
        %s302 = scalar_select %p301, %s300, 63
        %p303 = scmp.lt.s32.totalorder %s23, 0
        %s304 = scalar_select %p303, %s23, 0
        %s305 = sadd.s32 %s304, %s302
        %s306 = smul.addr %s305, 8
        %s307 = scalar_lea.vmem %s5, %s306
        %s308 = smul.u32 32, %s22
        %p309 = scmp.lt.s32.totalorder %s308, 63
        %s310 = scalar_select %p309, %s308, 63
        %p311 = scmp.lt.s32.totalorder %s24, 0
        %s312 = scalar_select %p311, %s24, 0
        %s313 = sadd.s32 %s312, %s310
        %s314 = smul.addr %s313, 8
        %s315 = scalar_lea.vmem %s1, %s314
        %s316 = smul.u32 32, %s22
        %s317 = smul.u32 16, %s24
        %p318 = scmp.lt.s32.totalorder %s317, 15
        %s319 = scalar_select %p318, %s317, 15
        %p320 = scmp.lt.s32.totalorder %s23, 0
        %s321 = scalar_select %p320, %s23, 0
        %s322 = sadd.s32 %s321, %s319
        %s323 = smul.addr %s322, 8
        %s324 = scalar_lea.vmem %s2, %s323
        %s325 = smul.u32 16, %s24
        %p326 = scmp.lt.s32.totalorder %s23, 0
        %s327 = scalar_select %p326, %s23, 0
        %s328 = scalar_lea.vmem %s3, %s327
        %p329 = scmp.lt.s32.totalorder %s23, 0
        %s330 = scalar_select %p329, %s23, 0
        %s331 = scalar_lea.vmem %s4, %s330
        %s332 = smul.u32 32, %s22
        %p333 = scmp.lt.s32.totalorder %s332, 63
        %s334 = scalar_select %p333, %s332, 63
        %p335 = scmp.lt.s32.totalorder %s23, 0
        %s336 = scalar_select %p335, %s23, 0
        %s337 = sadd.s32 %s336, %s334
        %s338 = smul.addr %s337, 8
        %s339 = scalar_lea.vmem %s5, %s338
        %s340 = smul.u32 32, %s22
        %p341 = scmp.eq.s32.totalorder %s24, 0
        // Predicated region
        $region45: #{conv_bn_act.1} parent=39 // pred_check
          %p342 = pneg %p341
        $region46: #{conv_bn_act.1} parent=39 // pred_check_branch
          %344 = sbr.rel (%p342) target = $region48
        $region47: #{conv_bn_act.1} parent=39 // pred_region
          %345 = vst [vmem:[#allocation2] sm:$0xff] 0.0
          %346 = vst [vmem:[#allocation2 + $0x8] sm:$0xff] 0.0
          %347 = vst [vmem:[#allocation2 + $0x10] sm:$0xff] 0.0
          %348 = vst [vmem:[#allocation2 + $0x18] sm:$0xff] 0.0
          %349 = vst [vmem:[#allocation2 + $0x20] sm:$0xff] 0.0
          %350 = vst [vmem:[#allocation2 + $0x28] sm:$0xff] 0.0
          %351 = vst [vmem:[#allocation2 + $0x30] sm:$0xff] 0.0
          %352 = vst [vmem:[#allocation2 + $0x38] sm:$0xff] 0.0
          %353 = vst [vmem:[#allocation2 + $0x40] sm:$0xff] 0.0
          %354 = vst [vmem:[#allocation2 + $0x48] sm:$0xff] 0.0
          %355 = vst [vmem:[#allocation2 + $0x50] sm:$0xff] 0.0
          %356 = vst [vmem:[#allocation2 + $0x58] sm:$0xff] 0.0
          %357 = vst [vmem:[#allocation2 + $0x60] sm:$0xff] 0.0
          %358 = vst [vmem:[#allocation2 + $0x68] sm:$0xff] 0.0
          %359 = vst [vmem:[#allocation2 + $0x70] sm:$0xff] 0.0
          %360 = vst [vmem:[#allocation2 + $0x78] sm:$0xff] 0.0
          %361 = vst [vmem:[#allocation2 + $0x80] sm:$0xff] 0.0
          %362 = vst [vmem:[#allocation2 + $0x88] sm:$0xff] 0.0
          %363 = vst [vmem:[#allocation2 + $0x90] sm:$0xff] 0.0
          %364 = vst [vmem:[#allocation2 + $0x98] sm:$0xff] 0.0
          %365 = vst [vmem:[#allocation2 + $0xa0] sm:$0xff] 0.0
          %366 = vst [vmem:[#allocation2 + $0xa8] sm:$0xff] 0.0
          %367 = vst [vmem:[#allocation2 + $0xb0] sm:$0xff] 0.0
          %368 = vst [vmem:[#allocation2 + $0xb8] sm:$0xff] 0.0
          %369 = vst [vmem:[#allocation2 + $0xc0] sm:$0xff] 0.0
          %370 = vst [vmem:[#allocation2 + $0xc8] sm:$0xff] 0.0
          %371 = vst [vmem:[#allocation2 + $0xd0] sm:$0xff] 0.0
          %372 = vst [vmem:[#allocation2 + $0xd8] sm:$0xff] 0.0
          %373 = vst [vmem:[#allocation2 + $0xe0] sm:$0xff] 0.0
          %374 = vst [vmem:[#allocation2 + $0xe8] sm:$0xff] 0.0
          %375 = vst [vmem:[#allocation2 + $0xf0] sm:$0xff] 0.0
          %376 = vst [vmem:[#allocation2 + $0xf8] sm:$0xff] 0.0
        $region48: #{conv_bn_act.1} parent=39 // pred_fallthru
          _
        %v377 = vld [vmem:[#allocation2] sm:$0xff]
        %v378 = vld [vmem:[#allocation2 + $0x8] sm:$0xff]
        %v379 = vld [vmem:[#allocation2 + $0x10] sm:$0xff]
        %v380 = vld [vmem:[#allocation2 + $0x18] sm:$0xff]
        %v381 = vld [vmem:[#allocation2 + $0x20] sm:$0xff]
        %v382 = vld [vmem:[#allocation2 + $0x28] sm:$0xff]
        %v383 = vld [vmem:[#allocation2 + $0x30] sm:$0xff]
        %v384 = vld [vmem:[#allocation2 + $0x38] sm:$0xff]
        %v385 = vld [vmem:[#allocation2 + $0x40] sm:$0xff]
        %v386 = vld [vmem:[#allocation2 + $0x48] sm:$0xff]
        %v387 = vld [vmem:[#allocation2 + $0x50] sm:$0xff]
        %v388 = vld [vmem:[#allocation2 + $0x58] sm:$0xff]
        %v389 = vld [vmem:[#allocation2 + $0x60] sm:$0xff]
        %v390 = vld [vmem:[#allocation2 + $0x68] sm:$0xff]
        %v391 = vld [vmem:[#allocation2 + $0x70] sm:$0xff]
        %v392 = vld [vmem:[#allocation2 + $0x78] sm:$0xff]
        %v393 = vld [vmem:[#allocation2 + $0x80] sm:$0xff]
        %v394 = vld [vmem:[#allocation2 + $0x88] sm:$0xff]
        %v395 = vld [vmem:[#allocation2 + $0x90] sm:$0xff]
        %v396 = vld [vmem:[#allocation2 + $0x98] sm:$0xff]
        %v397 = vld [vmem:[#allocation2 + $0xa0] sm:$0xff]
        %v398 = vld [vmem:[#allocation2 + $0xa8] sm:$0xff]
        %v399 = vld [vmem:[#allocation2 + $0xb0] sm:$0xff]
        %v400 = vld [vmem:[#allocation2 + $0xb8] sm:$0xff]
        %v401 = vld [vmem:[#allocation2 + $0xc0] sm:$0xff]
        %v402 = vld [vmem:[#allocation2 + $0xc8] sm:$0xff]
        %v403 = vld [vmem:[#allocation2 + $0xd0] sm:$0xff]
        %v404 = vld [vmem:[#allocation2 + $0xd8] sm:$0xff]
        %v405 = vld [vmem:[#allocation2 + $0xe0] sm:$0xff]
        %v406 = vld [vmem:[#allocation2 + $0xe8] sm:$0xff]
        %v407 = vld [vmem:[#allocation2 + $0xf0] sm:$0xff]
        %v408 = vld [vmem:[#allocation2 + $0xf8] sm:$0xff]
        %v409 = vld [vmem:[%s315] sm:$0xff]
        %v410 = vld [vmem:[%s315 + $0x8] sm:$0xff]
        %v411 = vld [vmem:[%s315 + $0x10] sm:$0xff]
        %v412 = vld [vmem:[%s315 + $0x18] sm:$0xff]
        %v413 = vld [vmem:[%s315 + $0x20] sm:$0xff]
        %v414 = vld [vmem:[%s315 + $0x28] sm:$0xff]
        %v415 = vld [vmem:[%s315 + $0x30] sm:$0xff]
        %v416 = vld [vmem:[%s315 + $0x38] sm:$0xff]
        %v417 = vld [vmem:[%s315 + $0x40] sm:$0xff]
        %v418 = vld [vmem:[%s315 + $0x48] sm:$0xff]
        %v419 = vld [vmem:[%s315 + $0x50] sm:$0xff]
        %v420 = vld [vmem:[%s315 + $0x58] sm:$0xff]
        %v421 = vld [vmem:[%s315 + $0x60] sm:$0xff]
        %v422 = vld [vmem:[%s315 + $0x68] sm:$0xff]
        %v423 = vld [vmem:[%s315 + $0x70] sm:$0xff]
        %v424 = vld [vmem:[%s315 + $0x78] sm:$0xff]
        %v425 = vld [vmem:[%s315 + $0x80] sm:$0xff]
        %v426 = vld [vmem:[%s315 + $0x88] sm:$0xff]
        %v427 = vld [vmem:[%s315 + $0x90] sm:$0xff]
        %v428 = vld [vmem:[%s315 + $0x98] sm:$0xff]
        %v429 = vld [vmem:[%s315 + $0xa0] sm:$0xff]
        %v430 = vld [vmem:[%s315 + $0xa8] sm:$0xff]
        %v431 = vld [vmem:[%s315 + $0xb0] sm:$0xff]
        %v432 = vld [vmem:[%s315 + $0xb8] sm:$0xff]
        %v433 = vld [vmem:[%s315 + $0xc0] sm:$0xff]
        %v434 = vld [vmem:[%s315 + $0xc8] sm:$0xff]
        %v435 = vld [vmem:[%s315 + $0xd0] sm:$0xff]
        %v436 = vld [vmem:[%s315 + $0xd8] sm:$0xff]
        %v437 = vld [vmem:[%s315 + $0xe0] sm:$0xff]
        %v438 = vld [vmem:[%s315 + $0xe8] sm:$0xff]
        %v439 = vld [vmem:[%s315 + $0xf0] sm:$0xff]
        %v440 = vld [vmem:[%s315 + $0xf8] sm:$0xff]
        %v441 = vld [vmem:[%s324] sm:$0xff]
        %v442 = vld [vmem:[%s324 + $0x8] sm:$0xff]
        %v443 = vld [vmem:[%s324 + $0x10] sm:$0xff]
        %v444 = vld [vmem:[%s324 + $0x18] sm:$0xff]
        %v445 = vld [vmem:[%s324 + $0x20] sm:$0xff]
        %v446 = vld [vmem:[%s324 + $0x28] sm:$0xff]
        %v447 = vld [vmem:[%s324 + $0x30] sm:$0xff]
        %v448 = vld [vmem:[%s324 + $0x38] sm:$0xff]
        %v449 = vld [vmem:[%s324 + $0x40] sm:$0xff]
        %v450 = vld [vmem:[%s324 + $0x48] sm:$0xff]
        %v451 = vld [vmem:[%s324 + $0x50] sm:$0xff]
        %v452 = vld [vmem:[%s324 + $0x58] sm:$0xff]
        %v453 = vld [vmem:[%s324 + $0x60] sm:$0xff]
        %v454 = vld [vmem:[%s324 + $0x68] sm:$0xff]
        %v455 = vld [vmem:[%s324 + $0x70] sm:$0xff]
        %v456 = vld [vmem:[%s324 + $0x78] sm:$0xff]
        %457 = vmatprep.subr.mxu0 0.0
        %458 = vmatpush1.msra.mxu0 %v441
        %459 = vmatprep.subr.mxu0 0.0
        %460 = vmatpush1.msra.mxu0 %v442
        %461 = vmatprep.subr.mxu0 0.0
        %462 = vmatpush1.msra.mxu0 %v443
        %463 = vmatprep.subr.mxu0 0.0
        %464 = vmatpush1.msra.mxu0 %v444
        %465 = vmatprep.subr.mxu0 0.0
        %466 = vmatpush1.msra.mxu0 %v445
        %467 = vmatprep.subr.mxu0 0.0
        %468 = vmatpush1.msra.mxu0 %v446
        %469 = vmatprep.subr.mxu0 0.0
        %470 = vmatpush1.msra.mxu0 %v447
        %471 = vmatprep.subr.mxu0 0.0
        %472 = vmatpush1.msra.mxu0 %v448
        %473 = vmatprep.subr.mxu0 0.0
        %474 = vmatpush1.msra.mxu0 %v449
        %475 = vmatprep.subr.mxu0 0.0
        %476 = vmatpush1.msra.mxu0 %v450
        %477 = vmatprep.subr.mxu0 0.0
        %478 = vmatpush1.msra.mxu0 %v451
        %479 = vmatprep.subr.mxu0 0.0
        %480 = vmatpush1.msra.mxu0 %v452
        %481 = vmatprep.subr.mxu0 0.0
        %482 = vmatpush1.msra.mxu0 %v453
        %483 = vmatprep.subr.mxu0 0.0
        %484 = vmatpush1.msra.mxu0 %v454
        %485 = vmatprep.subr.mxu0 0.0
        %486 = vmatpush1.msra.mxu0 %v455
        %487 = vmatprep.subr.mxu0 0.0
        %488 = vmatpush1.msra.mxu0 %v456
        %489 = vmatprep.subr.mxu0 0.0
        %490 = vmatpush1.msra.mxu0 0.0
        %491 = vmatprep.subr.mxu0 0.0
        %492 = vmatpush1.msra.mxu0 0.0
        %493 = vmatprep.subr.mxu0 0.0
        %494 = vmatpush1.msra.mxu0 0.0
        %495 = vmatprep.subr.mxu0 0.0
        %496 = vmatpush1.msra.mxu0 0.0
        %497 = vmatprep.subr.mxu0 0.0
        %498 = vmatpush1.msra.mxu0 0.0
        %499 = vmatprep.subr.mxu0 0.0
        %500 = vmatpush1.msra.mxu0 0.0
        %501 = vmatprep.subr.mxu0 0.0
        %502 = vmatpush1.msra.mxu0 0.0
        %503 = vmatprep.subr.mxu0 0.0
        %504 = vmatpush1.msra.mxu0 0.0
        %505 = vmatprep.subr.mxu0 0.0
        %506 = vmatpush1.msra.mxu0 0.0
        %507 = vmatprep.subr.mxu0 0.0
        %508 = vmatpush1.msra.mxu0 0.0
        %509 = vmatprep.subr.mxu0 0.0
        %510 = vmatpush1.msra.mxu0 0.0
        %511 = vmatprep.subr.mxu0 0.0
        %512 = vmatpush1.msra.mxu0 0.0
        %513 = vmatprep.subr.mxu0 0.0
        %514 = vmatpush1.msra.mxu0 0.0
        %515 = vmatprep.subr.mxu0 0.0
        %516 = vmatpush1.msra.mxu0 0.0
        %517 = vmatprep.subr.mxu0 0.0
        %518 = vmatpush1.msra.mxu0 0.0
        %519 = vmatprep.subr.mxu0 0.0
        %520 = vmatpush1.msra.mxu0 0.0
        %521 = vmatprep.mubr.f32.mxu0 0.0
        %522 = vmatmul.mubr.f32.gmra.mrb[0].mxu0 %v409
        %v523 = vpop.f32.mrb[0].mxu0
        %v524 = vadd.f32 0.0, %v523
        %v525 = vpop.f32.mrb[0].mxu0
        %526 = vmatprep.mubr.f32.mxu0 0.0
        %527 = vmatmul.mubr.f32.gmra.mrb[0].mxu0 %v410
        %v528 = vpop.f32.mrb[0].mxu0
        %v529 = vadd.f32 0.0, %v528
        %v530 = vpop.f32.mrb[0].mxu0
        %531 = vmatprep.mubr.f32.mxu0 0.0
        %532 = vmatmul.mubr.f32.gmra.mrb[0].mxu0 %v411
        %v533 = vpop.f32.mrb[0].mxu0
        %v534 = vadd.f32 0.0, %v533
        %v535 = vpop.f32.mrb[0].mxu0
        %536 = vmatprep.mubr.f32.mxu0 0.0
        %537 = vmatmul.mubr.f32.gmra.mrb[0].mxu0 %v412
        %v538 = vpop.f32.mrb[0].mxu0
        %v539 = vadd.f32 0.0, %v538
        %v540 = vpop.f32.mrb[0].mxu0
        %541 = vmatprep.mubr.f32.mxu0 0.0
        %542 = vmatmul.mubr.f32.gmra.mrb[0].mxu0 %v413
        %v543 = vpop.f32.mrb[0].mxu0
        %v544 = vadd.f32 0.0, %v543
        %v545 = vpop.f32.mrb[0].mxu0
        %546 = vmatprep.mubr.f32.mxu0 0.0
        %547 = vmatmul.mubr.f32.gmra.mrb[0].mxu0 %v414
        %v548 = vpop.f32.mrb[0].mxu0
        %v549 = vadd.f32 0.0, %v548
        %v550 = vpop.f32.mrb[0].mxu0
        %551 = vmatprep.mubr.f32.mxu0 0.0
        %552 = vmatmul.mubr.f32.gmra.mrb[0].mxu0 %v415
        %v553 = vpop.f32.mrb[0].mxu0
        %v554 = vadd.f32 0.0, %v553
        %v555 = vpop.f32.mrb[0].mxu0
        %556 = vmatprep.mubr.f32.mxu0 0.0
        %557 = vmatmul.mubr.f32.gmra.mrb[0].mxu0 %v416
        %v558 = vpop.f32.mrb[0].mxu0
        %v559 = vadd.f32 0.0, %v558
        %v560 = vpop.f32.mrb[0].mxu0
        %561 = vmatprep.mubr.f32.mxu0 0.0
        %562 = vmatmul.mubr.f32.gmra.mrb[0].mxu0 %v417
        %v563 = vpop.f32.mrb[0].mxu0
        %v564 = vadd.f32 0.0, %v563
        %v565 = vpop.f32.mrb[0].mxu0
        %566 = vmatprep.mubr.f32.mxu0 0.0
        %567 = vmatmul.mubr.f32.gmra.mrb[0].mxu0 %v418
        %v568 = vpop.f32.mrb[0].mxu0
        %v569 = vadd.f32 0.0, %v568
        %v570 = vpop.f32.mrb[0].mxu0
        %571 = vmatprep.mubr.f32.mxu0 0.0
        %572 = vmatmul.mubr.f32.gmra.mrb[0].mxu0 %v419
        %v573 = vpop.f32.mrb[0].mxu0
        %v574 = vadd.f32 0.0, %v573
        %v575 = vpop.f32.mrb[0].mxu0
        %576 = vmatprep.mubr.f32.mxu0 0.0
        %577 = vmatmul.mubr.f32.gmra.mrb[0].mxu0 %v420
        %v578 = vpop.f32.mrb[0].mxu0
        %v579 = vadd.f32 0.0, %v578
        %v580 = vpop.f32.mrb[0].mxu0
        %581 = vmatprep.mubr.f32.mxu0 0.0
        %582 = vmatmul.mubr.f32.gmra.mrb[0].mxu0 %v421
        %v583 = vpop.f32.mrb[0].mxu0
        %v584 = vadd.f32 0.0, %v583
        %v585 = vpop.f32.mrb[0].mxu0
        %586 = vmatprep.mubr.f32.mxu0 0.0
        %587 = vmatmul.mubr.f32.gmra.mrb[0].mxu0 %v422
        %v588 = vpop.f32.mrb[0].mxu0
        %v589 = vadd.f32 0.0, %v588
        %v590 = vpop.f32.mrb[0].mxu0
        %591 = vmatprep.mubr.f32.mxu0 0.0
        %592 = vmatmul.mubr.f32.gmra.mrb[0].mxu0 %v423
        %v593 = vpop.f32.mrb[0].mxu0
        %v594 = vadd.f32 0.0, %v593
        %v595 = vpop.f32.mrb[0].mxu0
        %596 = vmatprep.mubr.f32.mxu0 0.0
        %597 = vmatmul.mubr.f32.gmra.mrb[0].mxu0 %v424
        %v598 = vpop.f32.mrb[0].mxu0
        %v599 = vadd.f32 0.0, %v598
        %v600 = vpop.f32.mrb[0].mxu0
        %601 = vmatprep.mubr.f32.mxu0 0.0
        %602 = vmatmul.mubr.f32.gmra.mrb[0].mxu0 %v425
        %v603 = vpop.f32.mrb[0].mxu0
        %v604 = vadd.f32 0.0, %v603
        %v605 = vpop.f32.mrb[0].mxu0
        %606 = vmatprep.mubr.f32.mxu0 0.0
        %607 = vmatmul.mubr.f32.gmra.mrb[0].mxu0 %v426
        %v608 = vpop.f32.mrb[0].mxu0
        %v609 = vadd.f32 0.0, %v608
        %v610 = vpop.f32.mrb[0].mxu0
        %611 = vmatprep.mubr.f32.mxu0 0.0
        %612 = vmatmul.mubr.f32.gmra.mrb[0].mxu0 %v427
        %v613 = vpop.f32.mrb[0].mxu0
        %v614 = vadd.f32 0.0, %v613
        %v615 = vpop.f32.mrb[0].mxu0
        %616 = vmatprep.mubr.f32.mxu0 0.0
        %617 = vmatmul.mubr.f32.gmra.mrb[0].mxu0 %v428
        %v618 = vpop.f32.mrb[0].mxu0
        %v619 = vadd.f32 0.0, %v618
        %v620 = vpop.f32.mrb[0].mxu0
        %621 = vmatprep.mubr.f32.mxu0 0.0
        %622 = vmatmul.mubr.f32.gmra.mrb[0].mxu0 %v429
        %v623 = vpop.f32.mrb[0].mxu0
        %v624 = vadd.f32 0.0, %v623
        %v625 = vpop.f32.mrb[0].mxu0
        %626 = vmatprep.mubr.f32.mxu0 0.0
        %627 = vmatmul.mubr.f32.gmra.mrb[0].mxu0 %v430
        %v628 = vpop.f32.mrb[0].mxu0
        %v629 = vadd.f32 0.0, %v628
        %v630 = vpop.f32.mrb[0].mxu0
        %631 = vmatprep.mubr.f32.mxu0 0.0
        %632 = vmatmul.mubr.f32.gmra.mrb[0].mxu0 %v431
        %v633 = vpop.f32.mrb[0].mxu0
        %v634 = vadd.f32 0.0, %v633
        %v635 = vpop.f32.mrb[0].mxu0
        %636 = vmatprep.mubr.f32.mxu0 0.0
        %637 = vmatmul.mubr.f32.gmra.mrb[0].mxu0 %v432
        %v638 = vpop.f32.mrb[0].mxu0
        %v639 = vadd.f32 0.0, %v638
        %v640 = vpop.f32.mrb[0].mxu0
        %641 = vmatprep.mubr.f32.mxu0 0.0
        %642 = vmatmul.mubr.f32.gmra.mrb[0].mxu0 %v433
        %v643 = vpop.f32.mrb[0].mxu0
        %v644 = vadd.f32 0.0, %v643
        %v645 = vpop.f32.mrb[0].mxu0
        %646 = vmatprep.mubr.f32.mxu0 0.0
        %647 = vmatmul.mubr.f32.gmra.mrb[0].mxu0 %v434
        %v648 = vpop.f32.mrb[0].mxu0
        %v649 = vadd.f32 0.0, %v648
        %v650 = vpop.f32.mrb[0].mxu0
        %651 = vmatprep.mubr.f32.mxu0 0.0
        %652 = vmatmul.mubr.f32.gmra.mrb[0].mxu0 %v435
        %v653 = vpop.f32.mrb[0].mxu0
        %v654 = vadd.f32 0.0, %v653
        %v655 = vpop.f32.mrb[0].mxu0
        %656 = vmatprep.mubr.f32.mxu0 0.0
        %657 = vmatmul.mubr.f32.gmra.mrb[0].mxu0 %v436
        %v658 = vpop.f32.mrb[0].mxu0
        %v659 = vadd.f32 0.0, %v658
        %v660 = vpop.f32.mrb[0].mxu0
        %661 = vmatprep.mubr.f32.mxu0 0.0
        %662 = vmatmul.mubr.f32.gmra.mrb[0].mxu0 %v437
        %v663 = vpop.f32.mrb[0].mxu0
        %v664 = vadd.f32 0.0, %v663
        %v665 = vpop.f32.mrb[0].mxu0
        %666 = vmatprep.mubr.f32.mxu0 0.0
        %667 = vmatmul.mubr.f32.gmra.mrb[0].mxu0 %v438
        %v668 = vpop.f32.mrb[0].mxu0
        %v669 = vadd.f32 0.0, %v668
        %v670 = vpop.f32.mrb[0].mxu0
        %671 = vmatprep.mubr.f32.mxu0 0.0
        %672 = vmatmul.mubr.f32.gmra.mrb[0].mxu0 %v439
        %v673 = vpop.f32.mrb[0].mxu0
        %v674 = vadd.f32 0.0, %v673
        %v675 = vpop.f32.mrb[0].mxu0
        %676 = vmatprep.mubr.f32.mxu0 0.0
        %677 = vmatmul.mubr.f32.gmra.mrb[0].mxu0 %v440
        %v678 = vpop.f32.mrb[0].mxu0
        %v679 = vadd.f32 0.0, %v678
        %v680 = vpop.f32.mrb[0].mxu0
        %681 = vdwg.mxu0
        %v682 = vadd.f32 %v377, %v524
        %v683 = vadd.f32 %v378, %v529
        %v684 = vadd.f32 %v379, %v534
        %v685 = vadd.f32 %v380, %v539
        %v686 = vadd.f32 %v381, %v544
        %v687 = vadd.f32 %v382, %v549
        %v688 = vadd.f32 %v383, %v554
        %v689 = vadd.f32 %v384, %v559
        %v690 = vadd.f32 %v385, %v564
        %v691 = vadd.f32 %v386, %v569
        %v692 = vadd.f32 %v387, %v574
        %v693 = vadd.f32 %v388, %v579
        %v694 = vadd.f32 %v389, %v584
        %v695 = vadd.f32 %v390, %v589
        %v696 = vadd.f32 %v391, %v594
        %v697 = vadd.f32 %v392, %v599
        %v698 = vadd.f32 %v393, %v604
        %v699 = vadd.f32 %v394, %v609
        %v700 = vadd.f32 %v395, %v614
        %v701 = vadd.f32 %v396, %v619
        %v702 = vadd.f32 %v397, %v624
        %v703 = vadd.f32 %v398, %v629
        %v704 = vadd.f32 %v399, %v634
        %v705 = vadd.f32 %v400, %v639
        %v706 = vadd.f32 %v401, %v644
        %v707 = vadd.f32 %v402, %v649
        %v708 = vadd.f32 %v403, %v654
        %v709 = vadd.f32 %v404, %v659
        %v710 = vadd.f32 %v405, %v664
        %v711 = vadd.f32 %v406, %v669
        %v712 = vadd.f32 %v407, %v674
        %v713 = vadd.f32 %v408, %v679
        %714 = vst [vmem:[#allocation2] sm:$0xff] %v682
        %715 = vst [vmem:[#allocation2 + $0x8] sm:$0xff] %v683
        %716 = vst [vmem:[#allocation2 + $0x10] sm:$0xff] %v684
        %717 = vst [vmem:[#allocation2 + $0x18] sm:$0xff] %v685
        %718 = vst [vmem:[#allocation2 + $0x20] sm:$0xff] %v686
        %719 = vst [vmem:[#allocation2 + $0x28] sm:$0xff] %v687
        %720 = vst [vmem:[#allocation2 + $0x30] sm:$0xff] %v688
        %721 = vst [vmem:[#allocation2 + $0x38] sm:$0xff] %v689
        %722 = vst [vmem:[#allocation2 + $0x40] sm:$0xff] %v690
        %723 = vst [vmem:[#allocation2 + $0x48] sm:$0xff] %v691
        %724 = vst [vmem:[#allocation2 + $0x50] sm:$0xff] %v692
        %725 = vst [vmem:[#allocation2 + $0x58] sm:$0xff] %v693
        %726 = vst [vmem:[#allocation2 + $0x60] sm:$0xff] %v694
        %727 = vst [vmem:[#allocation2 + $0x68] sm:$0xff] %v695
        %728 = vst [vmem:[#allocation2 + $0x70] sm:$0xff] %v696
        %729 = vst [vmem:[#allocation2 + $0x78] sm:$0xff] %v697
        %730 = vst [vmem:[#allocation2 + $0x80] sm:$0xff] %v698
        %731 = vst [vmem:[#allocation2 + $0x88] sm:$0xff] %v699
        %732 = vst [vmem:[#allocation2 + $0x90] sm:$0xff] %v700
        %733 = vst [vmem:[#allocation2 + $0x98] sm:$0xff] %v701
        %734 = vst [vmem:[#allocation2 + $0xa0] sm:$0xff] %v702
        %735 = vst [vmem:[#allocation2 + $0xa8] sm:$0xff] %v703
        %736 = vst [vmem:[#allocation2 + $0xb0] sm:$0xff] %v704
        %737 = vst [vmem:[#allocation2 + $0xb8] sm:$0xff] %v705
        %738 = vst [vmem:[#allocation2 + $0xc0] sm:$0xff] %v706
        %739 = vst [vmem:[#allocation2 + $0xc8] sm:$0xff] %v707
        %740 = vst [vmem:[#allocation2 + $0xd0] sm:$0xff] %v708
        %741 = vst [vmem:[#allocation2 + $0xd8] sm:$0xff] %v709
        %742 = vst [vmem:[#allocation2 + $0xe0] sm:$0xff] %v710
        %743 = vst [vmem:[#allocation2 + $0xe8] sm:$0xff] %v711
        %744 = vst [vmem:[#allocation2 + $0xf0] sm:$0xff] %v712
        %745 = vst [vmem:[#allocation2 + $0xf8] sm:$0xff] %v713
        // Predicated region
        $region49: #{conv_bn_act.1} parent=39 // pred_check
          %p746 = pneg %p341
        $region50: #{conv_bn_act.1} parent=39 // pred_check_branch
          %748 = sbr.rel (%p746) target = $region52
        $region51: #{conv_bn_act.1} parent=39 // pred_region
          %v749 = vld [vmem:[#allocation2] sm:$0xff]
          %v750 = vld [vmem:[#allocation2 + $0x8] sm:$0xff]
          %v751 = vld [vmem:[#allocation2 + $0x10] sm:$0xff]
          %v752 = vld [vmem:[#allocation2 + $0x18] sm:$0xff]
          %v753 = vld [vmem:[#allocation2 + $0x20] sm:$0xff]
          %v754 = vld [vmem:[#allocation2 + $0x28] sm:$0xff]
          %v755 = vld [vmem:[#allocation2 + $0x30] sm:$0xff]
          %v756 = vld [vmem:[#allocation2 + $0x38] sm:$0xff]
          %v757 = vld [vmem:[#allocation2 + $0x40] sm:$0xff]
          %v758 = vld [vmem:[#allocation2 + $0x48] sm:$0xff]
          %v759 = vld [vmem:[#allocation2 + $0x50] sm:$0xff]
          %v760 = vld [vmem:[#allocation2 + $0x58] sm:$0xff]
          %v761 = vld [vmem:[#allocation2 + $0x60] sm:$0xff]
          %v762 = vld [vmem:[#allocation2 + $0x68] sm:$0xff]
          %v763 = vld [vmem:[#allocation2 + $0x70] sm:$0xff]
          %v764 = vld [vmem:[#allocation2 + $0x78] sm:$0xff]
          %v765 = vld [vmem:[#allocation2 + $0x80] sm:$0xff]
          %v766 = vld [vmem:[#allocation2 + $0x88] sm:$0xff]
          %v767 = vld [vmem:[#allocation2 + $0x90] sm:$0xff]
          %v768 = vld [vmem:[#allocation2 + $0x98] sm:$0xff]
          %v769 = vld [vmem:[#allocation2 + $0xa0] sm:$0xff]
          %v770 = vld [vmem:[#allocation2 + $0xa8] sm:$0xff]
          %v771 = vld [vmem:[#allocation2 + $0xb0] sm:$0xff]
          %v772 = vld [vmem:[#allocation2 + $0xb8] sm:$0xff]
          %v773 = vld [vmem:[#allocation2 + $0xc0] sm:$0xff]
          %v774 = vld [vmem:[#allocation2 + $0xc8] sm:$0xff]
          %v775 = vld [vmem:[#allocation2 + $0xd0] sm:$0xff]
          %v776 = vld [vmem:[#allocation2 + $0xd8] sm:$0xff]
          %v777 = vld [vmem:[#allocation2 + $0xe0] sm:$0xff]
          %v778 = vld [vmem:[#allocation2 + $0xe8] sm:$0xff]
          %v779 = vld [vmem:[#allocation2 + $0xf0] sm:$0xff]
          %v780 = vld [vmem:[#allocation2 + $0xf8] sm:$0xff]
          %v781 = vld [vmem:[%s328] sm:$0x1]
          %v783 = vlaneseq
          %v784 = vshrl.u32 %v783, 7
          %v785 = vsub.s32 0, %v784
          %v786 = vrot.slane %v781, %v785
          %v788 = vmul.f32 %v749, %v786
          %v789 = vmul.f32 %v750, %v786
          %v790 = vmul.f32 %v751, %v786
          %v791 = vmul.f32 %v752, %v786
          %v792 = vmul.f32 %v753, %v786
          %v793 = vmul.f32 %v754, %v786
          %v794 = vmul.f32 %v755, %v786
          %v795 = vmul.f32 %v756, %v786
          %v796 = vmul.f32 %v757, %v786
          %v797 = vmul.f32 %v758, %v786
          %v798 = vmul.f32 %v759, %v786
          %v799 = vmul.f32 %v760, %v786
          %v800 = vmul.f32 %v761, %v786
          %v801 = vmul.f32 %v762, %v786
          %v802 = vmul.f32 %v763, %v786
          %v803 = vmul.f32 %v764, %v786
          %v804 = vmul.f32 %v765, %v786
          %v805 = vmul.f32 %v766, %v786
          %v806 = vmul.f32 %v767, %v786
          %v807 = vmul.f32 %v768, %v786
          %v808 = vmul.f32 %v769, %v786
          %v809 = vmul.f32 %v770, %v786
          %v810 = vmul.f32 %v771, %v786
          %v811 = vmul.f32 %v772, %v786
          %v812 = vmul.f32 %v773, %v786
          %v813 = vmul.f32 %v774, %v786
          %v814 = vmul.f32 %v775, %v786
          %v815 = vmul.f32 %v776, %v786
          %v816 = vmul.f32 %v777, %v786
          %v817 = vmul.f32 %v778, %v786
          %v818 = vmul.f32 %v779, %v786
          %v819 = vmul.f32 %v780, %v786
          %v820 = vld [vmem:[%s331] sm:$0x1]
          %v822 = vlaneseq
          %v823 = vshrl.u32 %v822, 7
          %v824 = vsub.s32 0, %v823
          %v825 = vrot.slane %v820, %v824
          %v827 = vadd.f32 %v788, %v825
          %v828 = vadd.f32 %v789, %v825
          %v829 = vadd.f32 %v790, %v825
          %v830 = vadd.f32 %v791, %v825
          %v831 = vadd.f32 %v792, %v825
          %v832 = vadd.f32 %v793, %v825
          %v833 = vadd.f32 %v794, %v825
          %v834 = vadd.f32 %v795, %v825
          %v835 = vadd.f32 %v796, %v825
          %v836 = vadd.f32 %v797, %v825
          %v837 = vadd.f32 %v798, %v825
          %v838 = vadd.f32 %v799, %v825
          %v839 = vadd.f32 %v800, %v825
          %v840 = vadd.f32 %v801, %v825
          %v841 = vadd.f32 %v802, %v825
          %v842 = vadd.f32 %v803, %v825
          %v843 = vadd.f32 %v804, %v825
          %v844 = vadd.f32 %v805, %v825
          %v845 = vadd.f32 %v806, %v825
          %v846 = vadd.f32 %v807, %v825
          %v847 = vadd.f32 %v808, %v825
          %v848 = vadd.f32 %v809, %v825
          %v849 = vadd.f32 %v810, %v825
          %v850 = vadd.f32 %v811, %v825
          %v851 = vadd.f32 %v812, %v825
          %v852 = vadd.f32 %v813, %v825
          %v853 = vadd.f32 %v814, %v825
          %v854 = vadd.f32 %v815, %v825
          %v855 = vadd.f32 %v816, %v825
          %v856 = vadd.f32 %v817, %v825
          %v857 = vadd.f32 %v818, %v825
          %v858 = vadd.f32 %v819, %v825
          %v859 = vmax.f32 %v827, 0.0
          %v860 = vmax.f32 %v828, 0.0
          %v861 = vmax.f32 %v829, 0.0
          %v862 = vmax.f32 %v830, 0.0
          %v863 = vmax.f32 %v831, 0.0
          %v864 = vmax.f32 %v832, 0.0
          %v865 = vmax.f32 %v833, 0.0
          %v866 = vmax.f32 %v834, 0.0
          %v867 = vmax.f32 %v835, 0.0
          %v868 = vmax.f32 %v836, 0.0
          %v869 = vmax.f32 %v837, 0.0
          %v870 = vmax.f32 %v838, 0.0
          %v871 = vmax.f32 %v839, 0.0
          %v872 = vmax.f32 %v840, 0.0
          %v873 = vmax.f32 %v841, 0.0
          %v874 = vmax.f32 %v842, 0.0
          %v875 = vmax.f32 %v843, 0.0
          %v876 = vmax.f32 %v844, 0.0
          %v877 = vmax.f32 %v845, 0.0
          %v878 = vmax.f32 %v846, 0.0
          %v879 = vmax.f32 %v847, 0.0
          %v880 = vmax.f32 %v848, 0.0
          %v881 = vmax.f32 %v849, 0.0
          %v882 = vmax.f32 %v850, 0.0
          %v883 = vmax.f32 %v851, 0.0
          %v884 = vmax.f32 %v852, 0.0
          %v885 = vmax.f32 %v853, 0.0
          %v886 = vmax.f32 %v854, 0.0
          %v887 = vmax.f32 %v855, 0.0
          %v888 = vmax.f32 %v856, 0.0
          %v889 = vmax.f32 %v857, 0.0
          %v890 = vmax.f32 %v858, 0.0
          %s891 = sld [smem:[#allocation3]]
          %v892 = vstv %s891
          %v893 = vmul.f32 %v892, %v859
          %v894 = vmul.f32 %v892, %v860
          %v895 = vmul.f32 %v892, %v861
          %v896 = vmul.f32 %v892, %v862
          %v897 = vmul.f32 %v892, %v863
          %v898 = vmul.f32 %v892, %v864
          %v899 = vmul.f32 %v892, %v865
          %v900 = vmul.f32 %v892, %v866
          %v901 = vmul.f32 %v892, %v867
          %v902 = vmul.f32 %v892, %v868
          %v903 = vmul.f32 %v892, %v869
          %v904 = vmul.f32 %v892, %v870
          %v905 = vmul.f32 %v892, %v871
          %v906 = vmul.f32 %v892, %v872
          %v907 = vmul.f32 %v892, %v873
          %v908 = vmul.f32 %v892, %v874
          %v909 = vmul.f32 %v892, %v875
          %v910 = vmul.f32 %v892, %v876
          %v911 = vmul.f32 %v892, %v877
          %v912 = vmul.f32 %v892, %v878
          %v913 = vmul.f32 %v892, %v879
          %v914 = vmul.f32 %v892, %v880
          %v915 = vmul.f32 %v892, %v881
          %v916 = vmul.f32 %v892, %v882
          %v917 = vmul.f32 %v892, %v883
          %v918 = vmul.f32 %v892, %v884
          %v919 = vmul.f32 %v892, %v885
          %v920 = vmul.f32 %v892, %v886
          %v921 = vmul.f32 %v892, %v887
          %v922 = vmul.f32 %v892, %v888
          %v923 = vmul.f32 %v892, %v889
          %v924 = vmul.f32 %v892, %v890
          %s925 = sld [smem:[#allocation3 + $0x1]]
          %v926 = vstv %s925
          %v927 = vadd.f32 %v893, %v926
          %v928 = vadd.f32 %v894, %v926
          %v929 = vadd.f32 %v895, %v926
          %v930 = vadd.f32 %v896, %v926
          %v931 = vadd.f32 %v897, %v926
          %v932 = vadd.f32 %v898, %v926
          %v933 = vadd.f32 %v899, %v926
          %v934 = vadd.f32 %v900, %v926
          %v935 = vadd.f32 %v901, %v926
          %v936 = vadd.f32 %v902, %v926
          %v937 = vadd.f32 %v903, %v926
          %v938 = vadd.f32 %v904, %v926
          %v939 = vadd.f32 %v905, %v926
          %v940 = vadd.f32 %v906, %v926
          %v941 = vadd.f32 %v907, %v926
          %v942 = vadd.f32 %v908, %v926
          %v943 = vadd.f32 %v909, %v926
          %v944 = vadd.f32 %v910, %v926
          %v945 = vadd.f32 %v911, %v926
          %v946 = vadd.f32 %v912, %v926
          %v947 = vadd.f32 %v913, %v926
          %v948 = vadd.f32 %v914, %v926
          %v949 = vadd.f32 %v915, %v926
          %v950 = vadd.f32 %v916, %v926
          %v951 = vadd.f32 %v917, %v926
          %v952 = vadd.f32 %v918, %v926
          %v953 = vadd.f32 %v919, %v926
          %v954 = vadd.f32 %v920, %v926
          %v955 = vadd.f32 %v921, %v926
          %v956 = vadd.f32 %v922, %v926
          %v957 = vadd.f32 %v923, %v926
          %v958 = vadd.f32 %v924, %v926
          %959 = vst [vmem:[%s339] sm:$0xff] %v927
          %960 = vst [vmem:[%s339 + $0x8] sm:$0xff] %v928
          %961 = vst [vmem:[%s339 + $0x10] sm:$0xff] %v929
          %962 = vst [vmem:[%s339 + $0x18] sm:$0xff] %v930
          %963 = vst [vmem:[%s339 + $0x20] sm:$0xff] %v931
          %964 = vst [vmem:[%s339 + $0x28] sm:$0xff] %v932
          %965 = vst [vmem:[%s339 + $0x30] sm:$0xff] %v933
          %966 = vst [vmem:[%s339 + $0x38] sm:$0xff] %v934
          %967 = vst [vmem:[%s339 + $0x40] sm:$0xff] %v935
          %968 = vst [vmem:[%s339 + $0x48] sm:$0xff] %v936
          %969 = vst [vmem:[%s339 + $0x50] sm:$0xff] %v937
          %970 = vst [vmem:[%s339 + $0x58] sm:$0xff] %v938
          %971 = vst [vmem:[%s339 + $0x60] sm:$0xff] %v939
          %972 = vst [vmem:[%s339 + $0x68] sm:$0xff] %v940
          %973 = vst [vmem:[%s339 + $0x70] sm:$0xff] %v941
          %974 = vst [vmem:[%s339 + $0x78] sm:$0xff] %v942
          %975 = vst [vmem:[%s339 + $0x80] sm:$0xff] %v943
          %976 = vst [vmem:[%s339 + $0x88] sm:$0xff] %v944
          %977 = vst [vmem:[%s339 + $0x90] sm:$0xff] %v945
          %978 = vst [vmem:[%s339 + $0x98] sm:$0xff] %v946
          %979 = vst [vmem:[%s339 + $0xa0] sm:$0xff] %v947
          %980 = vst [vmem:[%s339 + $0xa8] sm:$0xff] %v948
          %981 = vst [vmem:[%s339 + $0xb0] sm:$0xff] %v949
          %982 = vst [vmem:[%s339 + $0xb8] sm:$0xff] %v950
          %983 = vst [vmem:[%s339 + $0xc0] sm:$0xff] %v951
          %984 = vst [vmem:[%s339 + $0xc8] sm:$0xff] %v952
          %985 = vst [vmem:[%s339 + $0xd0] sm:$0xff] %v953
          %986 = vst [vmem:[%s339 + $0xd8] sm:$0xff] %v954
          %987 = vst [vmem:[%s339 + $0xe0] sm:$0xff] %v955
          %988 = vst [vmem:[%s339 + $0xe8] sm:$0xff] %v956
          %989 = vst [vmem:[%s339 + $0xf0] sm:$0xff] %v957
          %990 = vst [vmem:[%s339 + $0xf8] sm:$0xff] %v958
        $region52: #{conv_bn_act.1} parent=39 // pred_fallthru
          _
        %s991 = smul.u32 32, %s22
        %p992 = scmp.lt.s32.totalorder %s991, 63
        %s993 = scalar_select %p992, %s991, 63
        %p994 = scmp.lt.s32.totalorder %s23, 0
        %s995 = scalar_select %p994, %s23, 0
        %s996 = sadd.s32 %s995, %s993
        %s997 = smul.addr %s996, 8
        %s998 = scalar_lea.vmem %s5, %s997
        // Predicated region
        $region53: #{conv_bn_act.1} parent=39 // pred_check
          %p999 = pneg %p185
        $region54: #{conv_bn_act.1} parent=39 // pred_check_branch
          %1001 = sbr.rel (%p999) target = $region56
        $region55: #{conv_bn_act.1} parent=39 // pred_region
          %s1002 = smul.u32 32, %s22
        $region56: #{conv_bn_act.1} parent=39 // pred_fallthru
          _
      $region40: #{conv_bn_act.1} parent=5 // pred_fallthru
        _
      %p1003 = scmp.le.s32.totalorder 2, %s12
      // Predicated region
      $region57: #{conv_bn_act.1} parent=5 // pred_check
        %p1004 = pneg %p1003
      $region58: #{conv_bn_act.1} parent=5 // pred_check_branch
        %1006 = sbr.rel (%p1004) target = $region60
      $region59: #{conv_bn_act.1} parent=5 // pred_region
        %s1007 = ssub.s32 %s12, 2
        // Predicated region
        $region61: #{conv_bn_act.1} parent=59 // pred_check
          %p1008 = pneg %p191
        $region62: #{conv_bn_act.1} parent=59 // pred_check_branch
          %1010 = sbr.rel (%p1008) target = $region64
        $region63: #{conv_bn_act.1} parent=59 // pred_region
          %s1011 = smul.u32 32, %s25
          %p1012 = scmp.lt.s32.totalorder %s1011, 63
          %s1013 = scalar_select %p1012, %s1011, 63
          %p1014 = scmp.lt.s32.totalorder %s26, 0
          %s1015 = scalar_select %p1014, %s26, 0
          %s1016 = sadd.s32 %s1015, %s1013
          %s1017 = smul.addr %s1016, 8
          %s1018 = scalar_lea.vmem %s5, %s1017
        $region64: #{conv_bn_act.1} parent=59 // pred_fallthru
          _
      $region60: #{conv_bn_act.1} parent=5 // pred_fallthru
        _
    $region6: #{conv_bn_act.1} parent=1 // loop_footer
      %s16 = sadd.s32 1, %s12
    $region7: #{conv_bn_act.1} parent=1 // loop_footer_branch
      %11 = sbr.rel target = $region3
    $region8: #{conv_bn_act.1} parent=1 // loop_exit
      _
    %1019 = vsyncpa [#allocation4], 1
    %s1020 = scalar_lea.sflag [#allocation4], 1
    %1021 = vsyncpa %s1020, 1

</llo_original>
